<compile_context>
chip_gen: v5e
topology: v5e:2x2
jax: 0.10.0
libtpu: 0.0.40
codegen_flags: <defaults>
</compile_context>

<pallas_src>
import jax
import jax.numpy as jnp
from jax.experimental import pallas as pl
from jax.experimental.pallas import tpu as pltpu

# Dimensions from the PyTorch module:
#   linear1: 126 -> 168, linear2: 168 -> 126, linear3: 126 -> 84, linear4: 84 -> 42
D_IN, D_H1, D_H2, D_H3, D_OUT = 42 * 3, 42 * 4, 42 * 3, 42 * 2, 42
LANE = 128
D_IN_PAD = 128    # 126 -> 128 (zero-padded lanes)
D_OUT_PAD = 128   # 42  -> 128 (zero-padded lanes, sliced off outside)


def _round_up(n, m):
    return (n + m - 1) // m * m


def dqn_kernel(x_ref, w1_ref, b1_ref, w2_ref, b2_ref,
               w3_ref, b3_ref, w4_ref, b4_ref, o_ref):
    # Entire MLP hot path in one kernel: 4 bf16 MXU matmuls (f32 accumulation)
    # + VPU bias/ReLU in f32. Intermediates never leave vregs/VMEM.
    h = jnp.dot(x_ref[...], w1_ref[...], preferred_element_type=jnp.float32)
    h = jnp.maximum(h + b1_ref[...], 0.0)
    h = jnp.dot(h.astype(jnp.bfloat16), w2_ref[...],
                preferred_element_type=jnp.float32)
    h = jnp.maximum(h + b2_ref[...], 0.0)
    h = jnp.dot(h.astype(jnp.bfloat16), w3_ref[...],
                preferred_element_type=jnp.float32)
    h = jnp.maximum(h + b3_ref[...], 0.0)
    h = jnp.dot(h.astype(jnp.bfloat16), w4_ref[...],
                preferred_element_type=jnp.float32)
    o_ref[...] = (h + b4_ref[...]).astype(o_ref.dtype)


def dqn_forward(x, params, tb=256):
    """x: [B, 126] float32. params: dict of (w, b) per layer, w as [in, out] f32.

    Returns [B, 42] float32 Q-values.
    """
    B = x.shape[0]
    w1, b1 = params["l1"]
    w2, b2 = params["l2"]
    w3, b3 = params["l3"]
    w4, b4 = params["l4"]

    # --- batch tiling ------------------------------------------------------
    TB = tb if B >= tb else _round_up(B, 8)   # sublane-aligned tile of rows
    B_pad = _round_up(B, TB)
    grid = (B_pad // TB,)

    # --- lane-dense, bf16 operands -----------------------------------------
    # x: pad batch to B_pad, lanes 126 -> 128; cast to bf16 for the MXU.
    x_p = jnp.pad(x, ((0, B_pad - B), (0, D_IN_PAD - D_IN))).astype(jnp.bfloat16)
    # w1: pad input rows 126 -> 128 (zero rows contribute nothing).
    w1_p = jnp.pad(w1, ((0, D_IN_PAD - D_IN), (0, 0))).astype(jnp.bfloat16)
    w2_p = w2.astype(jnp.bfloat16)
    w3_p = w3.astype(jnp.bfloat16)
    # w4/b4: pad output cols 42 -> 128 so the store path is full-lane vst.
    w4_p = jnp.pad(w4, ((0, 0), (0, D_OUT_PAD - D_OUT))).astype(jnp.bfloat16)
    b4_p = jnp.pad(b4, ((0, 0), (0, D_OUT_PAD - D_OUT)))          # stays f32
    # Biases stay f32 (added to the f32 accumulator).

    # x / out blocked on batch; weights & biases use constant index maps so
    # they are DMA'd once and stay VMEM-resident across all grid steps.
    x_spec = pl.BlockSpec((TB, D_IN_PAD), lambda i: (i, 0))
    out_spec = pl.BlockSpec((TB, D_OUT_PAD), lambda i: (i, 0))

    def const_spec(arr):
        return pl.BlockSpec(arr.shape, lambda i: (0, 0))

    out_pad = pl.pallas_call(
        dqn_kernel,
        out_shape=jax.ShapeDtypeStruct((B_pad, D_OUT_PAD), jnp.float32),
        grid=grid,
        in_specs=[
            x_spec,
            const_spec(w1_p), const_spec(b1),
            const_spec(w2_p), const_spec(b2),
            const_spec(w3_p), const_spec(b3),
            const_spec(w4_p), const_spec(b4_p),
        ],
        out_specs=out_spec,
        compiler_params=pltpu.CompilerParams(
            dimension_semantics=("parallel",)),   # 2 TCs on v7x
    )(x_p, w1_p, b1, w2_p, b2, w3_p, b3, w4_p, b4_p)

    return out_pad[:B, :D_OUT]


def init_params(key):
    """Deterministic init mimicking nn.Linear's U(-1/sqrt(fan_in), 1/sqrt(fan_in))."""
    dims = [(D_IN, D_H1), (D_H1, D_H2), (D_H2, D_H3), (D_H3, D_OUT)]
    params = {}
    for i, (fan_in, fan_out) in enumerate(dims, start=1):
        key, kw, kb = jax.random.split(key, 3)
        bound = 1.0 / jnp.sqrt(fan_in)
        # Stored as [in, out] so the kernel does x @ w + b.
        w = jax.random.uniform(kw, (fan_in, fan_out), jnp.float32, -bound, bound)
        b = jax.random.uniform(kb, (1, fan_out), jnp.float32, -bound, bound)
        params[f"l{i}"] = (w, b)
    return params


def reference_forward(x, params):
    # bf16-weight / f32-accumulate reference matching the kernel's numerics.
    h = x.astype(jnp.bfloat16)
    for name in ("l1", "l2", "l3"):
        w, b = params[name]
        h = jnp.dot(h, w.astype(jnp.bfloat16),
                    preferred_element_type=jnp.float32) + b
        h = jnp.maximum(h, 0.0).astype(jnp.bfloat16)
    w, b = params["l4"]
    return jnp.dot(h, w.astype(jnp.bfloat16),
                   preferred_element_type=jnp.float32) + b


if __name__ == "__main__":
    key = jax.random.PRNGKey(0)
    key, kx = jax.random.split(key)
    B = 8
    x = jax.random.normal(kx, (B, D_IN), jnp.float32)
    params = init_params(key)

    out = dqn_forward(x, params)
    out = jax.block_until_ready(out)

    ref = reference_forward(x, params)
    assert out.shape == (B, D_OUT), out.shape
    assert jnp.allclose(out, ref, atol=1e-2, rtol=1e-2), "mismatch vs reference"

    print("KERNEL_OK")
</pallas_src>

<mosaic_0001>
module attributes {stable_mosaic.version = 11 : i64} {
  func.func @dqn_kernel(%arg0: i32, %arg1: memref<8x128xbf16, #tpu.memory_space<vmem>>, %arg2: memref<128x168xbf16, #tpu.memory_space<vmem>>, %arg3: memref<1x168xf32, #tpu.memory_space<vmem>>, %arg4: memref<168x126xbf16, #tpu.memory_space<vmem>>, %arg5: memref<1x126xf32, #tpu.memory_space<vmem>>, %arg6: memref<126x84xbf16, #tpu.memory_space<vmem>>, %arg7: memref<1x84xf32, #tpu.memory_space<vmem>>, %arg8: memref<84x128xbf16, #tpu.memory_space<vmem>>, %arg9: memref<1x128xf32, #tpu.memory_space<vmem>>, %arg10: memref<8x128xf32, #tpu.memory_space<vmem>>) attributes {dimension_semantics = [#tpu.dimension_semantics<parallel>], iteration_bounds = array<i64: 1>, scalar_prefetch = 0 : i64, scratch_operands = 0 : i64, tpu.core_type = #tpu.core_type<tc>, window_params = [{transform_indices = @transform_0, window_bounds = array<i64: 8, 128>}, {pipeline_mode = #tpu.pipeline_mode<synchronous>, transform_indices = @transform_1, window_bounds = array<i64: 128, 168>}, {pipeline_mode = #tpu.pipeline_mode<synchronous>, transform_indices = @transform_2, window_bounds = array<i64: 1, 168>}, {pipeline_mode = #tpu.pipeline_mode<synchronous>, transform_indices = @transform_3, window_bounds = array<i64: 168, 126>}, {pipeline_mode = #tpu.pipeline_mode<synchronous>, transform_indices = @transform_4, window_bounds = array<i64: 1, 126>}, {pipeline_mode = #tpu.pipeline_mode<synchronous>, transform_indices = @transform_5, window_bounds = array<i64: 126, 84>}, {pipeline_mode = #tpu.pipeline_mode<synchronous>, transform_indices = @transform_6, window_bounds = array<i64: 1, 84>}, {pipeline_mode = #tpu.pipeline_mode<synchronous>, transform_indices = @transform_7, window_bounds = array<i64: 84, 128>}, {pipeline_mode = #tpu.pipeline_mode<synchronous>, transform_indices = @transform_8, window_bounds = array<i64: 1, 128>}, {transform_indices = @transform_9, window_bounds = array<i64: 8, 128>}]} {
    %c0 = arith.constant 0 : index
    %c0_0 = arith.constant 0 : index
    %0 = vector.load %arg1[%c0, %c0_0] : memref<8x128xbf16, #tpu.memory_space<vmem>>, vector<8x128xbf16>
    %c0_1 = arith.constant 0 : index
    %c0_2 = arith.constant 0 : index
    %1 = vector.load %arg2[%c0_1, %c0_2] : memref<128x168xbf16, #tpu.memory_space<vmem>>, vector<128x168xbf16>
    %cst = arith.constant dense<0.000000e+00> : vector<8x168xf32>
    %2 = tpu.matmul %0, %1, %cst {dimension_numbers = #tpu.dot_dimension_numbers<[1], [0], [0], [1], [0, 0, 1, 1], [], []>} : vector<8x128xbf16>, vector<128x168xbf16>, vector<8x168xf32> -> vector<8x168xf32>
    %c0_3 = arith.constant 0 : index
    %c0_4 = arith.constant 0 : index
    %3 = vector.load %arg3[%c0_3, %c0_4] : memref<1x168xf32, #tpu.memory_space<vmem>>, vector<1x168xf32>
    %4 = vector.broadcast %3 : vector<1x168xf32> to vector<8x168xf32>
    %5 = arith.addf %2, %4 : vector<8x168xf32>
    %cst_5 = arith.constant 0.000000e+00 : f32
    %6 = vector.broadcast %cst_5 : f32 to vector<8x168xf32>
    %7 = arith.maximumf %5, %6 : vector<8x168xf32>
    %8 = arith.truncf %7 : vector<8x168xf32> to vector<8x168xbf16>
    %c0_6 = arith.constant 0 : index
    %c0_7 = arith.constant 0 : index
    %9 = vector.load %arg4[%c0_6, %c0_7] : memref<168x126xbf16, #tpu.memory_space<vmem>>, vector<168x126xbf16>
    %cst_8 = arith.constant dense<0.000000e+00> : vector<8x126xf32>
    %10 = tpu.matmul %8, %9, %cst_8 {dimension_numbers = #tpu.dot_dimension_numbers<[1], [0], [0], [1], [0, 0, 1, 1], [], []>} : vector<8x168xbf16>, vector<168x126xbf16>, vector<8x126xf32> -> vector<8x126xf32>
    %c0_9 = arith.constant 0 : index
    %c0_10 = arith.constant 0 : index
    %11 = vector.load %arg5[%c0_9, %c0_10] : memref<1x126xf32, #tpu.memory_space<vmem>>, vector<1x126xf32>
    %12 = vector.broadcast %11 : vector<1x126xf32> to vector<8x126xf32>
    %13 = arith.addf %10, %12 : vector<8x126xf32>
    %cst_11 = arith.constant 0.000000e+00 : f32
    %14 = vector.broadcast %cst_11 : f32 to vector<8x126xf32>
    %15 = arith.maximumf %13, %14 : vector<8x126xf32>
    %16 = arith.truncf %15 : vector<8x126xf32> to vector<8x126xbf16>
    %c0_12 = arith.constant 0 : index
    %c0_13 = arith.constant 0 : index
    %17 = vector.load %arg6[%c0_12, %c0_13] : memref<126x84xbf16, #tpu.memory_space<vmem>>, vector<126x84xbf16>
    %cst_14 = arith.constant dense<0.000000e+00> : vector<8x84xf32>
    %18 = tpu.matmul %16, %17, %cst_14 {dimension_numbers = #tpu.dot_dimension_numbers<[1], [0], [0], [1], [0, 0, 1, 1], [], []>} : vector<8x126xbf16>, vector<126x84xbf16>, vector<8x84xf32> -> vector<8x84xf32>
    %c0_15 = arith.constant 0 : index
    %c0_16 = arith.constant 0 : index
    %19 = vector.load %arg7[%c0_15, %c0_16] : memref<1x84xf32, #tpu.memory_space<vmem>>, vector<1x84xf32>
    %20 = vector.broadcast %19 : vector<1x84xf32> to vector<8x84xf32>
    %21 = arith.addf %18, %20 : vector<8x84xf32>
    %cst_17 = arith.constant 0.000000e+00 : f32
    %22 = vector.broadcast %cst_17 : f32 to vector<8x84xf32>
    %23 = arith.maximumf %21, %22 : vector<8x84xf32>
    %24 = arith.truncf %23 : vector<8x84xf32> to vector<8x84xbf16>
    %c0_18 = arith.constant 0 : index
    %c0_19 = arith.constant 0 : index
    %25 = vector.load %arg8[%c0_18, %c0_19] : memref<84x128xbf16, #tpu.memory_space<vmem>>, vector<84x128xbf16>
    %cst_20 = arith.constant dense<0.000000e+00> : vector<8x128xf32>
    %26 = tpu.matmul %24, %25, %cst_20 {dimension_numbers = #tpu.dot_dimension_numbers<[1], [0], [0], [1], [0, 0, 1, 1], [], []>} : vector<8x84xbf16>, vector<84x128xbf16>, vector<8x128xf32> -> vector<8x128xf32>
    %c0_21 = arith.constant 0 : index
    %c0_22 = arith.constant 0 : index
    %27 = vector.load %arg9[%c0_21, %c0_22] : memref<1x128xf32, #tpu.memory_space<vmem>>, vector<1x128xf32>
    %28 = vector.broadcast %27 : vector<1x128xf32> to vector<8x128xf32>
    %29 = arith.addf %26, %28 : vector<8x128xf32>
    %c0_23 = arith.constant 0 : index
    %c0_24 = arith.constant 0 : index
    %30 = vector.load %arg10[%c0_23, %c0_24] : memref<8x128xf32, #tpu.memory_space<vmem>>, vector<8x128xf32>
    tpu.vector_store %arg10[%c0_23, %c0_24], %29 {strides = array<i32>} : memref<8x128xf32, #tpu.memory_space<vmem>>, vector<8x128xf32>,
    return
  }
  func.func @transform_0(%arg0: i32) -> (i32, i32) {
    %c0_i32 = arith.constant 0 : i32
    %c0_i32_0 = arith.constant 0 : i32
    return %arg0, %c0_i32 : i32, i32
  }
  func.func @transform_1(%arg0: i32) -> (i32, i32) {
    %c0_i32 = arith.constant 0 : i32
    %c0_i32_0 = arith.constant 0 : i32
    %c0_i32_1 = arith.constant 0 : i32
    return %c0_i32, %c0_i32_0 : i32, i32
  }
  func.func @transform_2(%arg0: i32) -> (i32, i32) {
    %c0_i32 = arith.constant 0 : i32
    %c0_i32_0 = arith.constant 0 : i32
    %c0_i32_1 = arith.constant 0 : i32
    return %c0_i32, %c0_i32_0 : i32, i32
  }
  func.func @transform_3(%arg0: i32) -> (i32, i32) {
    %c0_i32 = arith.constant 0 : i32
    %c0_i32_0 = arith.constant 0 : i32
    %c0_i32_1 = arith.constant 0 : i32
    return %c0_i32, %c0_i32_0 : i32, i32
  }
  func.func @transform_4(%arg0: i32) -> (i32, i32) {
    %c0_i32 = arith.constant 0 : i32
    %c0_i32_0 = arith.constant 0 : i32
    %c0_i32_1 = arith.constant 0 : i32
    return %c0_i32, %c0_i32_0 : i32, i32
  }
  func.func @transform_5(%arg0: i32) -> (i32, i32) {
    %c0_i32 = arith.constant 0 : i32
    %c0_i32_0 = arith.constant 0 : i32
    %c0_i32_1 = arith.constant 0 : i32
    return %c0_i32, %c0_i32_0 : i32, i32
  }
  func.func @transform_6(%arg0: i32) -> (i32, i32) {
    %c0_i32 = arith.constant 0 : i32
    %c0_i32_0 = arith.constant 0 : i32
    %c0_i32_1 = arith.constant 0 : i32
    return %c0_i32, %c0_i32_0 : i32, i32
  }
  func.func @transform_7(%arg0: i32) -> (i32, i32) {
    %c0_i32 = arith.constant 0 : i32
    %c0_i32_0 = arith.constant 0 : i32
    %c0_i32_1 = arith.constant 0 : i32
    return %c0_i32, %c0_i32_0 : i32, i32
  }
  func.func @transform_8(%arg0: i32) -> (i32, i32) {
    %c0_i32 = arith.constant 0 : i32
    %c0_i32_0 = arith.constant 0 : i32
    %c0_i32_1 = arith.constant 0 : i32
    return %c0_i32, %c0_i32_0 : i32, i32
  }
  func.func @transform_9(%arg0: i32) -> (i32, i32) {
    %c0_i32 = arith.constant 0 : i32
    %c0_i32_0 = arith.constant 0 : i32
    return %arg0, %c0_i32 : i32, i32
  }
}

</mosaic_0001>

<llo_original>
// kernel: tpu_custom_call.1
$region0: #{tpu_custom_call.1}
  #allocation0 [shape = 'u32[]', space=smem, size = 0x4, offset = 0x4, fixed_abs, tag = 'smem constant byte address 0x4 - core index']
  #allocation1 [shape = 'u32[72,128]{1,0:T(1,128)}', space=vmem, size = 0x9000, scoped, tag = 'internal scratch']
  %s0 = inlined_call_operand.vmem [shape: bf16[8,128], index: 0, kind: input, shape index: {}]
  %s1 = inlined_call_operand.vmem [shape: bf16[128,168], index: 1, kind: input, shape index: {}]
  %s2 = inlined_call_operand.vmem [shape: f32[1,168], index: 2, kind: input, shape index: {}]
  %s3 = inlined_call_operand.vmem [shape: bf16[168,126], index: 3, kind: input, shape index: {}]
  %s4 = inlined_call_operand.vmem [shape: f32[1,126], index: 4, kind: input, shape index: {}]
  %s5 = inlined_call_operand.vmem [shape: bf16[126,84], index: 5, kind: input, shape index: {}]
  %s6 = inlined_call_operand.vmem [shape: f32[1,84], index: 6, kind: input, shape index: {}]
  %s7 = inlined_call_operand.vmem [shape: bf16[84,128], index: 7, kind: input, shape index: {}]
  %s8 = inlined_call_operand.vmem [shape: f32[1,128], index: 8, kind: input, shape index: {}]
  %s9 = inlined_call_operand.hbm [shape: f32[8,128], index: 9, kind: output, shape index: {}]
  %s10 = sld [smem:[#allocation0]]
  $region46: #{tpu_custom_call.1} parent=0
    _
  %s12 = ssub.s32 1, %s10
  %s13 = scalar_select 0, %s12, %s10
  $region1: #{tpu_custom_call.1} parent=0
    #allocation2 [shape = 'u8[4096]{0}', space=vmem, size = 0x1000, scoped, tag = 'output window, operand 0, single buffered']
    #allocation3 [shape = 's32[1]{0}', space=sflag, size = 0x4, scoped, tag = 'scoped memory for tpu_custom_call.1']
    %14 = vsyncpa [#allocation3], 0
    // Predicated region
    $region2: #{tpu_custom_call.1} parent=1 // pred_check
      _
    $region3: #{tpu_custom_call.1} parent=1 // pred_check_branch
      %16 = sbr.rel (0) target = $region5
    $region4: #{tpu_custom_call.1} parent=1 // pred_region
      _
    $region5: #{tpu_custom_call.1} parent=1 // pred_fallthru
      _
    // Predicated region
    $region6: #{tpu_custom_call.1} parent=1 // pred_check
      _
    $region7: #{tpu_custom_call.1} parent=1 // pred_check_branch
      %18 = sbr.rel (0) target = $region9
    $region8: #{tpu_custom_call.1} parent=1 // pred_region
      _
    $region9: #{tpu_custom_call.1} parent=1 // pred_fallthru
      _
    // Predicated region
    $region10: #{tpu_custom_call.1} parent=1 // pred_check
      _
    $region11: #{tpu_custom_call.1} parent=1 // pred_check_branch
      %20 = sbr.rel (0) target = $region13
    $region12: #{tpu_custom_call.1} parent=1 // pred_region
      _
    $region13: #{tpu_custom_call.1} parent=1 // pred_fallthru
      _
    // Predicated region
    $region14: #{tpu_custom_call.1} parent=1 // pred_check
      _
    $region15: #{tpu_custom_call.1} parent=1 // pred_check_branch
      %22 = sbr.rel (0) target = $region17
    $region16: #{tpu_custom_call.1} parent=1 // pred_region
      _
    $region17: #{tpu_custom_call.1} parent=1 // pred_fallthru
      _
    // Predicated region
    $region18: #{tpu_custom_call.1} parent=1 // pred_check
      _
    $region19: #{tpu_custom_call.1} parent=1 // pred_check_branch
      %24 = sbr.rel (0) target = $region21
    $region20: #{tpu_custom_call.1} parent=1 // pred_region
      _
    $region21: #{tpu_custom_call.1} parent=1 // pred_fallthru
      _
    // Predicated region
    $region22: #{tpu_custom_call.1} parent=1 // pred_check
      _
    $region23: #{tpu_custom_call.1} parent=1 // pred_check_branch
      %26 = sbr.rel (0) target = $region25
    $region24: #{tpu_custom_call.1} parent=1 // pred_region
      _
    $region25: #{tpu_custom_call.1} parent=1 // pred_fallthru
      _
    // Predicated region
    $region26: #{tpu_custom_call.1} parent=1 // pred_check
      _
    $region27: #{tpu_custom_call.1} parent=1 // pred_check_branch
      %28 = sbr.rel (0) target = $region29
    $region28: #{tpu_custom_call.1} parent=1 // pred_region
      _
    $region29: #{tpu_custom_call.1} parent=1 // pred_fallthru
      _
    // Predicated region
    $region30: #{tpu_custom_call.1} parent=1 // pred_check
      _
    $region31: #{tpu_custom_call.1} parent=1 // pred_check_branch
      %30 = sbr.rel (0) target = $region33
    $region32: #{tpu_custom_call.1} parent=1 // pred_region
      _
    $region33: #{tpu_custom_call.1} parent=1 // pred_fallthru
      _
    // Predicated region
    $region34: #{tpu_custom_call.1} parent=1 // pred_check
      _
    $region35: #{tpu_custom_call.1} parent=1 // pred_check_branch
      %32 = sbr.rel (0) target = $region37
    $region36: #{tpu_custom_call.1} parent=1 // pred_region
      _
    $region37: #{tpu_custom_call.1} parent=1 // pred_fallthru
      _
    %v34 = vld [vmem:[%s0] sm:$0xf]
    %v35 = vld [vmem:[%s1] sm:$0xff]
    %v36 = vld [vmem:[%s1 + $0x8] sm:$0xff]
    %v37 = vld [vmem:[%s1 + $0x10] sm:$0xff]
    %v38 = vld [vmem:[%s1 + $0x18] sm:$0xff]
    %v39 = vld [vmem:[%s1 + $0x20] sm:$0xff]
    %v40 = vld [vmem:[%s1 + $0x28] sm:$0xff]
    %v41 = vld [vmem:[%s1 + $0x30] sm:$0xff]
    %v42 = vld [vmem:[%s1 + $0x38] sm:$0xff]
    %v43 = vld [vmem:[%s1 + $0x40] sm:$0xff]
    %v44 = vld [vmem:[%s1 + $0x48] sm:$0xff]
    %v45 = vld [vmem:[%s1 + $0x50] sm:$0xff]
    %v46 = vld [vmem:[%s1 + $0x58] sm:$0xff]
    %v47 = vld [vmem:[%s1 + $0x60] sm:$0xff]
    %v48 = vld [vmem:[%s1 + $0x68] sm:$0xff]
    %v49 = vld [vmem:[%s1 + $0x70] sm:$0xff]
    %v50 = vld [vmem:[%s1 + $0x78] sm:$0xff]
    %v51 = vld [vmem:[%s2] sm:$0x3]
    %v53 = vperm.slane %v51, 0
    %v54 = vperm.slane %v51, 1
    %v73 = vunpack.c.l.b16 %v35
    %v74 = vunpack.c.h.b16 %v35
    %v75 = vunpack.c.l.b16 %v36
    %v76 = vunpack.c.h.b16 %v36
    %v77 = vunpack.c.l.b16 %v37
    %v78 = vunpack.c.h.b16 %v37
    %v79 = vunpack.c.l.b16 %v38
    %v80 = vunpack.c.h.b16 %v38
    %v81 = vunpack.c.l.b16 %v39
    %v82 = vunpack.c.h.b16 %v39
    %v83 = vunpack.c.l.b16 %v40
    %v84 = vunpack.c.h.b16 %v40
    %v85 = vunpack.c.l.b16 %v41
    %v86 = vunpack.c.h.b16 %v41
    %v87 = vunpack.c.l.b16 %v42
    %v88 = vunpack.c.h.b16 %v42
    %v89 = vunpack.c.l.b16 %v43
    %v90 = vunpack.c.h.b16 %v43
    %v91 = vunpack.c.l.b16 %v44
    %v92 = vunpack.c.h.b16 %v44
    %v93 = vunpack.c.l.b16 %v45
    %v94 = vunpack.c.h.b16 %v45
    %v95 = vunpack.c.l.b16 %v46
    %v96 = vunpack.c.h.b16 %v46
    %v97 = vunpack.c.l.b16 %v47
    %v98 = vunpack.c.h.b16 %v47
    %v99 = vunpack.c.l.b16 %v48
    %v100 = vunpack.c.h.b16 %v48
    %v101 = vunpack.c.l.b16 %v49
    %v102 = vunpack.c.h.b16 %v49
    %v103 = vunpack.c.l.b16 %v50
    %v104 = vunpack.c.h.b16 %v50
    %v105 = vpack.c.b16 %v75, %v73
    %v106 = vpack.c.b16 %v76, %v74
    %v107 = vpack.c.b16 %v79, %v77
    %v108 = vpack.c.b16 %v80, %v78
    %v109 = vpack.c.b16 %v83, %v81
    %v110 = vpack.c.b16 %v84, %v82
    %v111 = vpack.c.b16 %v87, %v85
    %v112 = vpack.c.b16 %v88, %v86
    %v113 = vpack.c.b16 %v91, %v89
    %v114 = vpack.c.b16 %v92, %v90
    %v115 = vpack.c.b16 %v95, %v93
    %v116 = vpack.c.b16 %v96, %v94
    %v117 = vpack.c.b16 %v99, %v97
    %v118 = vpack.c.b16 %v100, %v98
    %v119 = vpack.c.b16 %v103, %v101
    %v120 = vpack.c.b16 %v104, %v102
    %137 = vmatpush.bf16.msra.mxu0 %v119
    %138 = vmatpush.bf16.msra.mxu0 %v117
    %139 = vmatpush.bf16.msra.mxu0 %v115
    %140 = vmatpush.bf16.msra.mxu0 %v113
    %141 = vmatpush.bf16.msra.mxu0 %v111
    %142 = vmatpush.bf16.msra.mxu0 %v109
    %143 = vmatpush.bf16.msra.mxu0 %v107
    %144 = vmatpush.bf16.msra.mxu0 %v105
    %145 = vmatmul.bf16.gmra.mxu0 %v34
    %v146 = vpop.f32.mrf.mxu0
    %v147 = vadd.f32 %v53, %v146
    %v148 = vpop.f32.mrf.mxu0
    %149 = vdwg.mxu0
    %150 = vmatpush.bf16.msra.mxu0 %v120
    %151 = vmatpush.bf16.msra.mxu0 %v118
    %152 = vmatpush.bf16.msra.mxu0 %v116
    %153 = vmatpush.bf16.msra.mxu0 %v114
    %154 = vmatpush.bf16.msra.mxu0 %v112
    %155 = vmatpush.bf16.msra.mxu0 %v110
    %156 = vmatpush.bf16.msra.mxu0 %v108
    %157 = vmatpush.bf16.msra.mxu0 %v106
    %158 = vmatmul.bf16.gmra.mxu0 %v34
    %v159 = vpop.f32.mrf.mxu0
    %v160 = vadd.f32 %v54, %v159
    %v161 = vpop.f32.mrf.mxu0
    %162 = vdwg.mxu0
    %v163 = vmax.f32 %v147, 0.0
    %v164 = vmax.f32 %v160, 0.0
    %v165 = vpack.c.bf16 %v163, %v163
    %v166 = vpack.c.bf16 %v164, %v164
    %v167 = vld [vmem:[%s3] sm:$0xf]
    %v168 = vld [vmem:[%s3 + $0x4] sm:$0xf]
    %v169 = vld [vmem:[%s3 + $0x8] sm:$0xf]
    %v170 = vld [vmem:[%s3 + $0xc] sm:$0xf]
    %v171 = vld [vmem:[%s3 + $0x10] sm:$0xf]
    %v172 = vld [vmem:[%s3 + $0x14] sm:$0xf]
    %v173 = vld [vmem:[%s3 + $0x18] sm:$0xf]
    %v174 = vld [vmem:[%s3 + $0x1c] sm:$0xf]
    %v175 = vld [vmem:[%s3 + $0x20] sm:$0xf]
    %v176 = vld [vmem:[%s3 + $0x24] sm:$0xf]
    %v177 = vld [vmem:[%s3 + $0x28] sm:$0xf]
    %v178 = vld [vmem:[%s3 + $0x2c] sm:$0xf]
    %v179 = vld [vmem:[%s3 + $0x30] sm:$0xf]
    %v180 = vld [vmem:[%s3 + $0x34] sm:$0xf]
    %v181 = vld [vmem:[%s3 + $0x38] sm:$0xf]
    %v182 = vld [vmem:[%s3 + $0x3c] sm:$0xf]
    %v183 = vld [vmem:[%s3 + $0x40] sm:$0xf]
    %v184 = vld [vmem:[%s3 + $0x44] sm:$0xf]
    %v185 = vld [vmem:[%s3 + $0x48] sm:$0xf]
    %v186 = vld [vmem:[%s3 + $0x4c] sm:$0xf]
    %v187 = vld [vmem:[%s3 + $0x50] sm:$0xf]
    %v188 = vld [vmem:[%s4] sm:$0x1]
    %v190 = vperm.slane %v188, 0
    %v213 = vunpack.c.l.b16 %v167
    %v214 = vunpack.c.l.b16 %v168
    %v215 = vunpack.c.l.b16 %v169
    %v216 = vunpack.c.l.b16 %v170
    %v217 = vunpack.c.l.b16 %v171
    %v218 = vunpack.c.l.b16 %v172
    %v219 = vunpack.c.l.b16 %v173
    %v220 = vunpack.c.l.b16 %v174
    %v221 = vunpack.c.l.b16 %v175
    %v222 = vunpack.c.l.b16 %v176
    %v223 = vunpack.c.l.b16 %v177
    %v224 = vunpack.c.l.b16 %v178
    %v225 = vunpack.c.l.b16 %v179
    %v226 = vunpack.c.l.b16 %v180
    %v227 = vunpack.c.l.b16 %v181
    %v228 = vunpack.c.l.b16 %v182
    %v229 = vunpack.c.l.b16 %v183
    %v230 = vunpack.c.l.b16 %v184
    %v231 = vunpack.c.l.b16 %v185
    %v232 = vunpack.c.l.b16 %v186
    %v233 = vunpack.c.l.b16 %v187
    %v234 = vpack.c.b16 %v214, %v213
    %v235 = vpack.c.b16 %v216, %v215
    %v236 = vpack.c.b16 %v218, %v217
    %v237 = vpack.c.b16 %v220, %v219
    %v238 = vpack.c.b16 %v222, %v221
    %v239 = vpack.c.b16 %v224, %v223
    %v240 = vpack.c.b16 %v226, %v225
    %v241 = vpack.c.b16 %v228, %v227
    %v242 = vpack.c.b16 %v230, %v229
    %v243 = vpack.c.b16 %v232, %v231
    %v244 = vpack.c.b16 %v233, %v233
    %vm255 = vcmask 326656
    %v257 = vsel %vm255, %v166, 0
    %vm259 = vcmask 1043456
    %v261 = vsel %vm259, %v244, 0
    %263 = vmatpush.bf16.msra.mxu0 %v241
    %264 = vmatpush.bf16.msra.mxu0 %v240
    %265 = vmatpush.bf16.msra.mxu0 %v239
    %266 = vmatpush.bf16.msra.mxu0 %v238
    %267 = vmatpush.bf16.msra.mxu0 %v237
    %268 = vmatpush.bf16.msra.mxu0 %v236
    %269 = vmatpush.bf16.msra.mxu0 %v235
    %270 = vmatpush.bf16.msra.mxu0 %v234
    %271 = vmatmul.bf16.gmra.mxu0 %v165
    %v272 = vpop.f32.mrf.mxu0
    %v273 = vadd.f32 %v190, %v272
    %v274 = vpop.f32.mrf.mxu0
    %275 = vdwg.mxu0
    %276 = vmatpush.bf16.msra.mxu0 0
    %277 = vmatpush.bf16.msra.mxu0 0
    %278 = vmatpush.bf16.msra.mxu0 0
    %279 = vmatpush.bf16.msra.mxu0 0
    %280 = vmatpush.bf16.msra.mxu0 0
    %281 = vmatpush.bf16.msra.mxu0 %v261
    %282 = vmatpush.bf16.msra.mxu0 %v243
    %283 = vmatpush.bf16.msra.mxu0 %v242
    %284 = vmatmul.bf16.gmra.mxu0 %v257
    %v285 = vpop.f32.mrf.mxu0
    %v286 = vadd.f32 %v273, %v285
    %v287 = vpop.f32.mrf.mxu0
    %288 = vdwg.mxu0
    %v289 = vmax.f32 %v286, 0.0
    %v290 = vpack.c.bf16 %v289, %v289
    %v291 = vld [vmem:[%s5] sm:$0xf]
    %v292 = vld [vmem:[%s5 + $0x4] sm:$0xf]
    %v293 = vld [vmem:[%s5 + $0x8] sm:$0xf]
    %v294 = vld [vmem:[%s5 + $0xc] sm:$0xf]
    %v295 = vld [vmem:[%s5 + $0x10] sm:$0xf]
    %v296 = vld [vmem:[%s5 + $0x14] sm:$0xf]
    %v297 = vld [vmem:[%s5 + $0x18] sm:$0xf]
    %v298 = vld [vmem:[%s5 + $0x1c] sm:$0xf]
    %v299 = vld [vmem:[%s5 + $0x20] sm:$0xf]
    %v300 = vld [vmem:[%s5 + $0x24] sm:$0xf]
    %v301 = vld [vmem:[%s5 + $0x28] sm:$0xf]
    %v302 = vld [vmem:[%s5 + $0x2c] sm:$0xf]
    %v303 = vld [vmem:[%s5 + $0x30] sm:$0xf]
    %v304 = vld [vmem:[%s5 + $0x34] sm:$0xf]
    %v305 = vld [vmem:[%s5 + $0x38] sm:$0xf]
    %v306 = vld [vmem:[%s5 + $0x3c] sm:$0x7]
    %v307 = vld [vmem:[%s6] sm:$0x1]
    %v309 = vperm.slane %v307, 0
    %v327 = vunpack.c.l.b16 %v291
    %v328 = vunpack.c.l.b16 %v292
    %v329 = vunpack.c.l.b16 %v293
    %v330 = vunpack.c.l.b16 %v294
    %v331 = vunpack.c.l.b16 %v295
    %v332 = vunpack.c.l.b16 %v296
    %v333 = vunpack.c.l.b16 %v297
    %v334 = vunpack.c.l.b16 %v298
    %v335 = vunpack.c.l.b16 %v299
    %v336 = vunpack.c.l.b16 %v300
    %v337 = vunpack.c.l.b16 %v301
    %v338 = vunpack.c.l.b16 %v302
    %v339 = vunpack.c.l.b16 %v303
    %v340 = vunpack.c.l.b16 %v304
    %v341 = vunpack.c.l.b16 %v305
    %v342 = vunpack.c.l.b16 %v306
    %v343 = vpack.c.b16 %v328, %v327
    %v344 = vpack.c.b16 %v330, %v329
    %v345 = vpack.c.b16 %v332, %v331
    %v346 = vpack.c.b16 %v334, %v333
    %v347 = vpack.c.b16 %v336, %v335
    %v348 = vpack.c.b16 %v338, %v337
    %v349 = vpack.c.b16 %v340, %v339
    %v350 = vpack.c.b16 %v342, %v341
    %vm358 = vcmask 1031168
    %v360 = vsel %vm358, %v290, 0
    %vm362 = vcmask 1046528
    %v364 = vsel %vm362, %v350, 0
    %366 = vmatpush.bf16.msra.mxu0 %v364
    %367 = vmatpush.bf16.msra.mxu0 %v349
    %368 = vmatpush.bf16.msra.mxu0 %v348
    %369 = vmatpush.bf16.msra.mxu0 %v347
    %370 = vmatpush.bf16.msra.mxu0 %v346
    %371 = vmatpush.bf16.msra.mxu0 %v345
    %372 = vmatpush.bf16.msra.mxu0 %v344
    %373 = vmatpush.bf16.msra.mxu0 %v343
    %374 = vmatmul.bf16.gmra.mxu0 %v360
    %v375 = vpop.f32.mrf.mxu0
    %v376 = vadd.f32 %v309, %v375
    %v377 = vpop.f32.mrf.mxu0
    %378 = vdwg.mxu0
    %v379 = vmax.f32 %v376, 0.0
    %v380 = vpack.c.bf16 %v379, %v379
    %v381 = vld [vmem:[%s7] sm:$0xf]
    %v382 = vld [vmem:[%s7 + $0x4] sm:$0xf]
    %v383 = vld [vmem:[%s7 + $0x8] sm:$0xf]
    %v384 = vld [vmem:[%s7 + $0xc] sm:$0xf]
    %v385 = vld [vmem:[%s7 + $0x10] sm:$0xf]
    %v386 = vld [vmem:[%s7 + $0x14] sm:$0xf]
    %v387 = vld [vmem:[%s7 + $0x18] sm:$0xf]
    %v388 = vld [vmem:[%s7 + $0x1c] sm:$0xf]
    %v389 = vld [vmem:[%s7 + $0x20] sm:$0xf]
    %v390 = vld [vmem:[%s7 + $0x24] sm:$0xf]
    %v391 = vld [vmem:[%s7 + $0x28] sm:$0x3]
    %v392 = vld [vmem:[%s8] sm:$0x1]
    %v394 = vperm.slane %v392, 0
    %v407 = vunpack.c.l.b16 %v381
    %v408 = vunpack.c.l.b16 %v382
    %v409 = vunpack.c.l.b16 %v383
    %v410 = vunpack.c.l.b16 %v384
    %v411 = vunpack.c.l.b16 %v385
    %v412 = vunpack.c.l.b16 %v386
    %v413 = vunpack.c.l.b16 %v387
    %v414 = vunpack.c.l.b16 %v388
    %v415 = vunpack.c.l.b16 %v389
    %v416 = vunpack.c.l.b16 %v390
    %v417 = vunpack.c.l.b16 %v391
    %v418 = vpack.c.b16 %v408, %v407
    %v419 = vpack.c.b16 %v410, %v409
    %v420 = vpack.c.b16 %v412, %v411
    %v421 = vpack.c.b16 %v414, %v413
    %v422 = vpack.c.b16 %v416, %v415
    %v423 = vpack.c.b16 %v417, %v417
    %vm429 = vcmask 687104
    %v431 = vsel %vm429, %v380, 0
    %vm433 = vcmask 1041408
    %v435 = vsel %vm433, %v423, 0
    %437 = vmatpush.bf16.msra.mxu0 0
    %438 = vmatpush.bf16.msra.mxu0 0
    %439 = vmatpush.bf16.msra.mxu0 %v435
    %440 = vmatpush.bf16.msra.mxu0 %v422
    %441 = vmatpush.bf16.msra.mxu0 %v421
    %442 = vmatpush.bf16.msra.mxu0 %v420
    %443 = vmatpush.bf16.msra.mxu0 %v419
    %444 = vmatpush.bf16.msra.mxu0 %v418
    %445 = vmatmul.bf16.gmra.mxu0 %v431
    %v446 = vpop.f32.mrf.mxu0
    %v447 = vadd.f32 %v394, %v446
    %v448 = vpop.f32.mrf.mxu0
    %449 = vdwg.mxu0
    %450 = vst [vmem:[#allocation2] sm:$0xff] %v447
    // Predicated region
    $region38: #{tpu_custom_call.1} parent=1 // pred_check
      _
    $region39: #{tpu_custom_call.1} parent=1 // pred_check_branch
      %452 = sbr.rel (0) target = $region41
    $region40: #{tpu_custom_call.1} parent=1 // pred_region
      %454 = vsyncadd [#allocation3], 0
      %s456 = sshll.u32 [#allocation2], 4
      %s457 = int_to_ptr.vmem [resolvable:$true] %s456
      %s458 = sshll.u32 %s9, 4
      %s459 = int_to_ptr.hbm [resolvable:$true] %s458
      %461 = dma.vmem_to_hbm [thread:$0]  %s457, 128, %s459, [#allocation3]
    $region41: #{tpu_custom_call.1} parent=1 // pred_fallthru
      _
    // Predicated region
    $region42: #{tpu_custom_call.1} parent=1 // pred_check
      _
    $region43: #{tpu_custom_call.1} parent=1 // pred_check_branch
      %463 = sbr.rel (0) target = $region45
    $region44: #{tpu_custom_call.1} parent=1 // pred_region
      %465 = dma.done [#allocation3], 128
    $region45: #{tpu_custom_call.1} parent=1 // pred_fallthru
      _
    %466 = vsyncpa [#allocation3], 1

</llo_original>
